<compile_context>
chip_gen: v5e
topology: v5e:2x2
jax: 0.10.0
libtpu: 0.0.40
codegen_flags: <defaults>
</compile_context>

<pallas_src>
from functools import partial

import jax
import jax.numpy as jnp
from jax.experimental import pallas as pl
from jax.experimental.pallas import tpu as pltpu

LN_EPS = 1e-5


def _round_up(n, m):
    return ((n + m - 1) // m) * m


def _vmem_capacity_bytes():
    # Conservative default = v7x per-TC VMEM (smallest across generations).
    cap = 64 * 1024 * 1024
    try:
        info = pltpu.get_tpu_info()
        c = getattr(info, "vmem_capacity_bytes", None)
        if c:
            cap = int(c)
    except Exception:
        pass
    return cap


def _activation(h, activation):
    if activation == "relu":
        return jnp.maximum(h, 0.0)
    elif activation == "gelu":
        # PyTorch nn.GELU default is the exact erf form.
        return jax.nn.gelu(h, approximate=False)
    raise ValueError(f"unsupported activation: {activation}")


def _epilogue(y, x_ref, b2_ref, gamma_ref, beta_ref, o_ref):
    # y: (TM, D) f32 partial = h @ W2.  Add bias2 + residual, then LayerNorm.
    y = y + b2_ref[...].astype(jnp.float32) + x_ref[...].astype(jnp.float32)
    mean = jnp.mean(y, axis=-1, keepdims=True)
    cent = y - mean
    var = jnp.mean(cent * cent, axis=-1, keepdims=True)
    yn = cent * jax.lax.rsqrt(var + LN_EPS)
    out = yn * gamma_ref[...].astype(jnp.float32) \
        + beta_ref[...].astype(jnp.float32)
    o_ref[...] = out.astype(o_ref.dtype)


def ffn_kernel_fused(x_ref, w1_ref, b1_ref, w2_ref, b2_ref, gamma_ref,
                     beta_ref, o_ref, *, activation):
    # Resident-weight fast path: single grid axis over row tiles, no scratch.
    h = jnp.dot(x_ref[...], w1_ref[...], preferred_element_type=jnp.float32)
    h = _activation(h + b1_ref[...].astype(jnp.float32), activation)
    y = jnp.dot(h.astype(w2_ref.dtype), w2_ref[...],
                preferred_element_type=jnp.float32)
    _epilogue(y, x_ref, b2_ref, gamma_ref, beta_ref, o_ref)


def ffn_kernel_acc(x_ref, w1_ref, b1_ref, w2_ref, b2_ref, gamma_ref,
                   beta_ref, o_ref, acc_ref, *, activation):
    # Streamed-weight path: hidden dim is the (innermost, "arbitrary")
    # reduction grid axis; f32 VMEM accumulator across H chunks.
    h_idx = pl.program_id(1)

    h = jnp.dot(x_ref[...], w1_ref[...], preferred_element_type=jnp.float32)
    h = _activation(h + b1_ref[...].astype(jnp.float32), activation)
    part = jnp.dot(h.astype(w2_ref.dtype), w2_ref[...],
                   preferred_element_type=jnp.float32)

    @pl.when(h_idx == 0)
    def _():
        acc_ref[...] = part          # direct write: no zero-fill + add round trip

    @pl.when(h_idx > 0)
    def _():
        acc_ref[...] += part

    @pl.when(h_idx == pl.num_programs(1) - 1)
    def _():
        _epilogue(acc_ref[...], x_ref, b2_ref, gamma_ref, beta_ref, o_ref)


def _est_fused(tile_m, d, h, x_it, w_it):
    # VMEM estimate for the resident-weight path (double-buffered x/out,
    # W1+W2 counted with 2 buffers to be safe, f32 h + downcast copy,
    # epilogue f32 temporaries, small 1-row params).
    return (2 * 2 * tile_m * d * x_it
            + 2 * 2 * d * h * w_it
            + tile_m * h * (4 + w_it)
            + 2 * tile_m * d * 4
            + 2 * (h + 3 * d) * 4)


def _est_acc(tile_m, tile_h, d, x_it, w_it):
    # VMEM estimate for the streamed-weight path (adds the f32 accumulator).
    return (2 * 2 * tile_m * d * x_it
            + 2 * 2 * d * tile_h * w_it
            + tile_m * d * 4
            + tile_m * tile_h * (4 + w_it)
            + 2 * tile_m * d * 4
            + 2 * (tile_h + 3 * d) * 4)


def ffn_forward(x, w1, b1, w2, b2, gamma, beta, *, tile_m=512, tile_h=None,
                activation="relu", compute_dtype=None):
    """x: (batch, seq, d_model) -> (batch, seq, d_model)."""
    B, S, D = x.shape
    H = w1.shape[1]
    N = B * S

    # Optional mixed precision for f32 models: bf16 operands + f32 MXU
    # accumulation recover full MXU rate (~3x on v5e/v6e/v7x) at the cost of
    # not bit-matching an all-f32 reference.  Off by default.
    if compute_dtype is not None:
        x = x.astype(compute_dtype)
        w1 = w1.astype(compute_dtype)
        w2 = w2.astype(compute_dtype)
    out_dtype = x.dtype

    x_it = jnp.dtype(x.dtype).itemsize
    w_it = jnp.dtype(w1.dtype).itemsize

    # Row tile: large for arithmetic intensity when weights must stream, but
    # capped so there are >=2 row tiles whenever N permits (v7x has 2 TCs and
    # the row axis is the "parallel" one; extra per-step cost on 1-TC chips
    # is ~0.35 us and negligible).
    if N > 8:
        tile_m_cap = _round_up(-(-N // 2), 8)
    else:
        tile_m_cap = _round_up(max(N, 1), 8)
    tile_m = max(8, min(tile_m, tile_m_cap))

    capacity = _vmem_capacity_bytes()
    budget = (capacity * 3) // 4          # ~48 MiB on v7x, ~96 MiB on v5e/v6e

    resident = (tile_h is not None and tile_h >= H)
    if tile_h is None:
        # Prefer fully-resident weights: constant index_map => W1/W2 are
        # fetched from HBM exactly once for the whole kernel instead of once
        # per row tile.  Shrink tile_m a bit if that is what it takes.
        for cand in (tile_m, 256, 128):
            cand = max(8, min(cand, tile_m))
            if _est_fused(cand, D, H, x_it, w_it) <= budget:
                resident = True
                tile_m = cand
                break
        if not resident:
            # Streamed weights: keep tile_m large, pick the widest H chunk
            # (multiple of 128) that fits the budget.
            for cand in (4096, 2048, 1024, 512, 256, 128):
                if cand < H and _est_acc(tile_m, cand, D, x_it, w_it) <= budget:
                    tile_h = cand
                    break
            if tile_h is None:
                tile_h = 128
                while tile_m > 8 and \
                        _est_acc(tile_m, tile_h, D, x_it, w_it) > budget:
                    tile_m = max(8, _round_up(tile_m // 2, 8))

    n_pad = _round_up(N, tile_m)
    grid_m = n_pad // tile_m

    x2 = x.reshape(N, D)
    if n_pad != N:
        x2 = jnp.pad(x2, ((0, n_pad - N), (0, 0)))

    if resident:
        Hp = H
        w1_p, b1_p, w2_p = w1, b1, w2
    else:
        # Zero-pad H so the hidden tile divides it.  Padded W1 columns / b1
        # entries give act(0) = 0 for relu (and gelu), contributing exactly 0
        # through the padded W2 rows.
        Hp = _round_up(H, tile_h)
        if Hp != H:
            w1_p = jnp.pad(w1, ((0, 0), (0, Hp - H)))
            b1_p = jnp.pad(b1, ((0, Hp - H),))
            w2_p = jnp.pad(w2, ((0, Hp - H), (0, 0)))
        else:
            w1_p, b1_p, w2_p = w1, b1, w2

    # 2-D (1, F) views of the 1-D parameters so they broadcast row-wise.
    b1_2 = b1_p.reshape(1, Hp)
    b2_2 = b2.reshape(1, D)
    g_2 = gamma.reshape(1, D)
    be_2 = beta.reshape(1, D)

    vmem_limit = int(max(budget, 32 * 1024 * 1024))

    # Cost estimate reflecting actual HBM traffic (weights re-streamed per
    # row tile only when H is tiled).
    weight_bytes = 2 * D * Hp * w_it
    if not resident:
        weight_bytes *= grid_m
    cost = pl.CostEstimate(
        flops=2 * 2 * N * D * H,
        transcendentals=0,
        bytes_accessed=weight_bytes + 2 * n_pad * D * x_it + (Hp + 3 * D) * 4,
    )

    if resident:
        grid = (grid_m,)
        in_specs = [
            pl.BlockSpec((tile_m, D), lambda i: (i, 0)),   # x rows
            pl.BlockSpec((D, Hp), lambda i: (0, 0)),       # W1 (resident)
            pl.BlockSpec((1, Hp), lambda i: (0, 0)),       # b1
            pl.BlockSpec((Hp, D), lambda i: (0, 0)),       # W2 (resident)
            pl.BlockSpec((1, D), lambda i: (0, 0)),        # b2
            pl.BlockSpec((1, D), lambda i: (0, 0)),        # LN gamma
            pl.BlockSpec((1, D), lambda i: (0, 0)),        # LN beta
        ]
        out_spec = pl.BlockSpec((tile_m, D), lambda i: (i, 0))
        scratch = []
        kernel = partial(ffn_kernel_fused, activation=activation)
        dims = ("parallel",)
    else:
        grid = (grid_m, Hp // tile_h)
        in_specs = [
            pl.BlockSpec((tile_m, D), lambda i, j: (i, 0)),   # x rows
            pl.BlockSpec((D, tile_h), lambda i, j: (0, j)),   # W1 chunk
            pl.BlockSpec((1, tile_h), lambda i, j: (0, j)),   # b1 chunk
            pl.BlockSpec((tile_h, D), lambda i, j: (j, 0)),   # W2 chunk
            pl.BlockSpec((1, D), lambda i, j: (0, 0)),        # b2
            pl.BlockSpec((1, D), lambda i, j: (0, 0)),        # LN gamma
            pl.BlockSpec((1, D), lambda i, j: (0, 0)),        # LN beta
        ]
        out_spec = pl.BlockSpec((tile_m, D), lambda i, j: (i, 0))
        scratch = [pltpu.VMEM((tile_m, D), jnp.float32)]
        kernel = partial(ffn_kernel_acc, activation=activation)
        dims = ("parallel", "arbitrary")

    out = pl.pallas_call(
        kernel,
        out_shape=jax.ShapeDtypeStruct((n_pad, D), out_dtype),
        grid_spec=pltpu.PrefetchScalarGridSpec(
            num_scalar_prefetch=0,
            grid=grid,
            in_specs=in_specs,
            out_specs=out_spec,
            scratch_shapes=scratch,
        ),
        compiler_params=pltpu.CompilerParams(
            dimension_semantics=dims,
            vmem_limit_bytes=vmem_limit,
        ),
        cost_estimate=cost,
    )(x2, w1_p, b1_2, w2_p, b2_2, g_2, be_2)

    return out[:N].reshape(B, S, D)


def ffn_reference(x, w1, b1, w2, b2, gamma, beta):
    h = jnp.maximum(x @ w1 + b1, 0.0)
    y = h @ w2 + b2 + x
    mean = jnp.mean(y, axis=-1, keepdims=True)
    var = jnp.mean((y - mean) ** 2, axis=-1, keepdims=True)
    return (y - mean) / jnp.sqrt(var + LN_EPS) * gamma + beta


if __name__ == "__main__":
    key = jax.random.PRNGKey(0)
    batch, seq, d_model, hidden = 2, 8, 32, 64

    k_x, k_w1, k_b1, k_w2, k_b2 = jax.random.split(key, 5)

    x = jax.random.normal(k_x, (batch, seq, d_model), dtype=jnp.float32)

    # Deterministic parameter init (PyTorch-Linear-style uniform bounds).
    lim1 = 1.0 / (d_model ** 0.5)
    lim2 = 1.0 / (hidden ** 0.5)
    w1 = jax.random.uniform(k_w1, (d_model, hidden), minval=-lim1, maxval=lim1,
                            dtype=jnp.float32)
    b1 = jax.random.uniform(k_b1, (hidden,), minval=-lim1, maxval=lim1,
                            dtype=jnp.float32)
    w2 = jax.random.uniform(k_w2, (hidden, d_model), minval=-lim2, maxval=lim2,
                            dtype=jnp.float32)
    b2 = jax.random.uniform(k_b2, (d_model,), minval=-lim2, maxval=lim2,
                            dtype=jnp.float32)
    gamma = jnp.ones((d_model,), dtype=jnp.float32)   # nn.LayerNorm default
    beta = jnp.zeros((d_model,), dtype=jnp.float32)

    out = ffn_forward(x, w1, b1, w2, b2, gamma, beta)
    out = jax.block_until_ready(out)

    ref = ffn_reference(x, w1, b1, w2, b2, gamma, beta)
    assert out.shape == (batch, seq, d_model)
    assert jnp.allclose(out, ref, atol=1e-4, rtol=1e-4), "mismatch vs reference"

    print("KERNEL_OK")
</pallas_src>

<mosaic_0001>
module attributes {stable_mosaic.version = 11 : i64} {
  func.func @ffn_kernel_fused(%arg0: i32, %arg1: memref<8x32xf32, #tpu.memory_space<vmem>>, %arg2: memref<32x64xf32, #tpu.memory_space<vmem>>, %arg3: memref<1x64xf32, #tpu.memory_space<vmem>>, %arg4: memref<64x32xf32, #tpu.memory_space<vmem>>, %arg5: memref<1x32xf32, #tpu.memory_space<vmem>>, %arg6: memref<1x32xf32, #tpu.memory_space<vmem>>, %arg7: memref<1x32xf32, #tpu.memory_space<vmem>>, %arg8: memref<8x32xf32, #tpu.memory_space<vmem>>) attributes {dimension_semantics = [#tpu.dimension_semantics<parallel>], iteration_bounds = array<i64: 2>, scalar_prefetch = 0 : i64, scratch_operands = 0 : i64, tpu.core_type = #tpu.core_type<tc>, window_params = [{transform_indices = @transform_0, window_bounds = array<i64: 8, 32>}, {pipeline_mode = #tpu.pipeline_mode<synchronous>, transform_indices = @transform_1, window_bounds = array<i64: 32, 64>}, {pipeline_mode = #tpu.pipeline_mode<synchronous>, transform_indices = @transform_2, window_bounds = array<i64: 1, 64>}, {pipeline_mode = #tpu.pipeline_mode<synchronous>, transform_indices = @transform_3, window_bounds = array<i64: 64, 32>}, {pipeline_mode = #tpu.pipeline_mode<synchronous>, transform_indices = @transform_4, window_bounds = array<i64: 1, 32>}, {pipeline_mode = #tpu.pipeline_mode<synchronous>, transform_indices = @transform_5, window_bounds = array<i64: 1, 32>}, {pipeline_mode = #tpu.pipeline_mode<synchronous>, transform_indices = @transform_6, window_bounds = array<i64: 1, 32>}, {transform_indices = @transform_7, window_bounds = array<i64: 8, 32>}]} {
    %c0 = arith.constant 0 : index
    %c0_0 = arith.constant 0 : index
    %0 = vector.load %arg1[%c0, %c0_0] : memref<8x32xf32, #tpu.memory_space<vmem>>, vector<8x32xf32>
    %c0_1 = arith.constant 0 : index
    %c0_2 = arith.constant 0 : index
    %1 = vector.load %arg2[%c0_1, %c0_2] : memref<32x64xf32, #tpu.memory_space<vmem>>, vector<32x64xf32>
    %cst = arith.constant dense<0.000000e+00> : vector<8x64xf32>
    %2 = tpu.matmul %0, %1, %cst {dimension_numbers = #tpu.dot_dimension_numbers<[1], [0], [0], [1], [0, 0, 1, 1], [], []>} : vector<8x32xf32>, vector<32x64xf32>, vector<8x64xf32> -> vector<8x64xf32>
    %c0_3 = arith.constant 0 : index
    %c0_4 = arith.constant 0 : index
    %3 = vector.load %arg3[%c0_3, %c0_4] : memref<1x64xf32, #tpu.memory_space<vmem>>, vector<1x64xf32>
    %4 = vector.broadcast %3 : vector<1x64xf32> to vector<8x64xf32>
    %5 = arith.addf %2, %4 : vector<8x64xf32>
    %cst_5 = arith.constant 0.000000e+00 : f32
    %6 = vector.broadcast %cst_5 : f32 to vector<8x64xf32>
    %7 = arith.maximumf %5, %6 : vector<8x64xf32>
    %c0_6 = arith.constant 0 : index
    %c0_7 = arith.constant 0 : index
    %8 = vector.load %arg4[%c0_6, %c0_7] : memref<64x32xf32, #tpu.memory_space<vmem>>, vector<64x32xf32>
    %cst_8 = arith.constant dense<0.000000e+00> : vector<8x32xf32>
    %9 = tpu.matmul %7, %8, %cst_8 {dimension_numbers = #tpu.dot_dimension_numbers<[1], [0], [0], [1], [0, 0, 1, 1], [], []>} : vector<8x64xf32>, vector<64x32xf32>, vector<8x32xf32> -> vector<8x32xf32>
    %c0_9 = arith.constant 0 : index
    %c0_10 = arith.constant 0 : index
    %10 = vector.load %arg5[%c0_9, %c0_10] : memref<1x32xf32, #tpu.memory_space<vmem>>, vector<1x32xf32>
    %11 = vector.broadcast %10 : vector<1x32xf32> to vector<8x32xf32>
    %12 = arith.addf %9, %11 : vector<8x32xf32>
    %c0_11 = arith.constant 0 : index
    %c0_12 = arith.constant 0 : index
    %13 = vector.load %arg1[%c0_11, %c0_12] : memref<8x32xf32, #tpu.memory_space<vmem>>, vector<8x32xf32>
    %14 = arith.addf %12, %13 : vector<8x32xf32>
    %cst_13 = arith.constant dense<0.000000e+00> : vector<8xf32>
    %15 = vector.multi_reduction <add>, %14, %cst_13 [1] : vector<8x32xf32> to vector<8xf32>
    %16 = vector.shape_cast %15 : vector<8xf32> to vector<8x1xf32>
    %cst_14 = arith.constant 3.200000e+01 : f32
    %17 = vector.broadcast %cst_14 : f32 to vector<8x1xf32>
    %18 = arith.divf %16, %17 : vector<8x1xf32>
    %19 = vector.broadcast %18 : vector<8x1xf32> to vector<8x32xf32>
    %20 = arith.subf %14, %19 : vector<8x32xf32>
    %21 = arith.mulf %20, %20 : vector<8x32xf32>
    %cst_15 = arith.constant dense<0.000000e+00> : vector<8xf32>
    %22 = vector.multi_reduction <add>, %21, %cst_15 [1] : vector<8x32xf32> to vector<8xf32>
    %23 = vector.shape_cast %22 : vector<8xf32> to vector<8x1xf32>
    %cst_16 = arith.constant 3.200000e+01 : f32
    %24 = vector.broadcast %cst_16 : f32 to vector<8x1xf32>
    %25 = arith.divf %23, %24 : vector<8x1xf32>
    %cst_17 = arith.constant 9.99999974E-6 : f32
    %26 = vector.broadcast %cst_17 : f32 to vector<8x1xf32>
    %27 = arith.addf %25, %26 : vector<8x1xf32>
    %28 = math.rsqrt %27 : vector<8x1xf32>
    %29 = vector.broadcast %28 : vector<8x1xf32> to vector<8x32xf32>
    %30 = arith.mulf %20, %29 : vector<8x32xf32>
    %c0_18 = arith.constant 0 : index
    %c0_19 = arith.constant 0 : index
    %31 = vector.load %arg6[%c0_18, %c0_19] : memref<1x32xf32, #tpu.memory_space<vmem>>, vector<1x32xf32>
    %32 = vector.broadcast %31 : vector<1x32xf32> to vector<8x32xf32>
    %33 = arith.mulf %30, %32 : vector<8x32xf32>
    %c0_20 = arith.constant 0 : index
    %c0_21 = arith.constant 0 : index
    %34 = vector.load %arg7[%c0_20, %c0_21] : memref<1x32xf32, #tpu.memory_space<vmem>>, vector<1x32xf32>
    %35 = vector.broadcast %34 : vector<1x32xf32> to vector<8x32xf32>
    %36 = arith.addf %33, %35 : vector<8x32xf32>
    %c0_22 = arith.constant 0 : index
    %c0_23 = arith.constant 0 : index
    %37 = vector.load %arg8[%c0_22, %c0_23] : memref<8x32xf32, #tpu.memory_space<vmem>>, vector<8x32xf32>
    tpu.vector_store %arg8[%c0_22, %c0_23], %36 {strides = array<i32>} : memref<8x32xf32, #tpu.memory_space<vmem>>, vector<8x32xf32>,
    return
  }
  func.func @transform_0(%arg0: i32) -> (i32, i32) {
    %c0_i32 = arith.constant 0 : i32
    %c0_i32_0 = arith.constant 0 : i32
    return %arg0, %c0_i32 : i32, i32
  }
  func.func @transform_1(%arg0: i32) -> (i32, i32) {
    %c0_i32 = arith.constant 0 : i32
    %c0_i32_0 = arith.constant 0 : i32
    %c0_i32_1 = arith.constant 0 : i32
    return %c0_i32, %c0_i32_0 : i32, i32
  }
  func.func @transform_2(%arg0: i32) -> (i32, i32) {
    %c0_i32 = arith.constant 0 : i32
    %c0_i32_0 = arith.constant 0 : i32
    %c0_i32_1 = arith.constant 0 : i32
    return %c0_i32, %c0_i32_0 : i32, i32
  }
  func.func @transform_3(%arg0: i32) -> (i32, i32) {
    %c0_i32 = arith.constant 0 : i32
    %c0_i32_0 = arith.constant 0 : i32
    %c0_i32_1 = arith.constant 0 : i32
    return %c0_i32, %c0_i32_0 : i32, i32
  }
  func.func @transform_4(%arg0: i32) -> (i32, i32) {
    %c0_i32 = arith.constant 0 : i32
    %c0_i32_0 = arith.constant 0 : i32
    %c0_i32_1 = arith.constant 0 : i32
    return %c0_i32, %c0_i32_0 : i32, i32
  }
  func.func @transform_5(%arg0: i32) -> (i32, i32) {
    %c0_i32 = arith.constant 0 : i32
    %c0_i32_0 = arith.constant 0 : i32
    %c0_i32_1 = arith.constant 0 : i32
    return %c0_i32, %c0_i32_0 : i32, i32
  }
  func.func @transform_6(%arg0: i32) -> (i32, i32) {
    %c0_i32 = arith.constant 0 : i32
    %c0_i32_0 = arith.constant 0 : i32
    %c0_i32_1 = arith.constant 0 : i32
    return %c0_i32, %c0_i32_0 : i32, i32
  }
  func.func @transform_7(%arg0: i32) -> (i32, i32) {
    %c0_i32 = arith.constant 0 : i32
    %c0_i32_0 = arith.constant 0 : i32
    return %arg0, %c0_i32 : i32, i32
  }
}

</mosaic_0001>

<llo_original>
// kernel: tpu_custom_call.1
$region0: #{tpu_custom_call.1}
  #allocation0 [shape = 'u32[]', space=smem, size = 0x4, offset = 0x4, fixed_abs, tag = 'smem constant byte address 0x4 - core index']
  #allocation1 [shape = 'u32[72,128]{1,0:T(1,128)}', space=vmem, size = 0x9000, scoped, tag = 'internal scratch']
  %s0 = inlined_call_operand.vmem [shape: f32[16,32], index: 0, kind: input, shape index: {}]
  %s1 = inlined_call_operand.vmem [shape: f32[32,64], index: 1, kind: input, shape index: {}]
  %s2 = inlined_call_operand.vmem [shape: f32[1,64], index: 2, kind: input, shape index: {}]
  %s3 = inlined_call_operand.vmem [shape: f32[64,32], index: 3, kind: input, shape index: {}]
  %s4 = inlined_call_operand.vmem [shape: f32[1,32], index: 4, kind: input, shape index: {}]
  %s5 = inlined_call_operand.vmem [shape: f32[1,32], index: 5, kind: input, shape index: {}]
  %s6 = inlined_call_operand.vmem [shape: f32[1,32], index: 6, kind: input, shape index: {}]
  %s7 = inlined_call_operand.hbm [shape: f32[16,32], index: 7, kind: output, shape index: {}]
  %s8 = sld [smem:[#allocation0]]
  $region61: #{tpu_custom_call.1} parent=0
    _
  %s10 = ssub.s32 1, %s8
  %s11 = scalar_select 0, %s10, %s8
  $region1: #{tpu_custom_call.1} parent=0
    #allocation2 [shape = 'u8[8192]{0}', space=vmem, size = 0x2000, scoped, tag = 'output window, operand 0']
    #allocation3 [shape = 's32[2]{0}', space=sflag, size = 0x8, scoped, tag = 'scoped memory for tpu_custom_call.1']
    %12 = vsyncpa [#allocation3], 0
    %s13 = scalar_lea.sflag [#allocation3], 1
    %14 = vsyncpa %s13, 0
    loop: start=0, step=1, limit=4
    $region2: #{tpu_custom_call.1} parent=1 // loop_pre_header
      _
    $region3: #{tpu_custom_call.1} parent=1 // loop_header
      %s16 = sphi 0, %s20
      %p17 = scmp.ge.s32.totalorder %s16, 4
      %s26 = sphi 0, %s28
      %s29 = sphi 0, %s26
      %s30 = sphi 0, %s29
      %s46 = sphi 0, %s30
      %s50 = sphi 0, %s50
      %s52 = sphi 0, %s50
      %s53 = sphi 0, %s52
      %s67 = sphi 0, %s53
      %s71 = sphi 0, %s71
      %s73 = sphi 0, %s71
      %s74 = sphi 0, %s73
      %s88 = sphi 0, %s74
      %s92 = sphi 0, %s92
      %s94 = sphi 0, %s92
      %s95 = sphi 0, %s94
      %s109 = sphi 0, %s95
      %s113 = sphi 0, %s113
      %s115 = sphi 0, %s113
      %s116 = sphi 0, %s115
      %s130 = sphi 0, %s116
      %s134 = sphi 0, %s134
      %s136 = sphi 0, %s134
      %s137 = sphi 0, %s136
      %s151 = sphi 0, %s137
      %s155 = sphi 0, %s155
      %s157 = sphi 0, %s155
      %s158 = sphi 0, %s157
      %s172 = sphi 0, %s158
      %s178 = sphi 0, %s180
      %s181 = sphi 0, %s178
      %s182 = sphi 0, %s181
      %s198 = sphi 0, %s182
    $region4: #{tpu_custom_call.1} parent=1 // loop_header_branch
      %19 = sbr.rel (%p17) target = $region8
    $region5: #{tpu_custom_call.1} parent=1 // loop_body
      %s21 = ssub.s32 %s16, 1
      %s22 = ssub.s32 %s16, 2
      %s23 = sadd.s32 %s16, 1
      %s24 = ssub.s32 %s16, %s23
      %p25 = scmp.eq.s32.totalorder %s24, 0
      %s27 = sadd.s32 %s26, 1
      %s28 = scalar_select %p25, %s26, %s27
      %p31 = pneg %p25
      %p32 = scmp.eq.s32.totalorder %s16, 1
      %p33 = por %p31, %p32
      %p34 = scmp.ne.s32.totalorder %s26, %s29
      %p35 = scmp.eq.s32.totalorder %s16, 0
      %p36 = por %p34, %p35
      %p37 = scmp.ne.s32.totalorder %s26, %s29
      %p38 = scmp.eq.s32.totalorder %s21, 1
      %p39 = por %p37, %p38
      %p40 = scmp.ne.s32.totalorder %s29, %s30
      %p41 = scmp.eq.s32.totalorder %s21, 0
      %p42 = por %p40, %p41
      %p43 = scmp.ne.s32.totalorder %s29, %s30
      %p44 = scmp.eq.s32.totalorder %s22, 1
      %p45 = por %p43, %p44
      %p47 = scmp.ne.s32.totalorder %s30, %s46
      %p48 = scmp.eq.s32.totalorder %s22, 0
      %p49 = por %p47, %p48
      %s51 = sadd.s32 %s50, 1
      %p54 = scmp.eq.s32.totalorder %s16, 1
      %p55 = scmp.ne.s32.totalorder %s50, %s52
      %p56 = scmp.eq.s32.totalorder %s16, 0
      %p57 = por %p55, %p56
      %p58 = scmp.ne.s32.totalorder %s50, %s52
      %p59 = scmp.eq.s32.totalorder %s21, 1
      %p60 = por %p58, %p59
      %p61 = scmp.ne.s32.totalorder %s52, %s53
      %p62 = scmp.eq.s32.totalorder %s21, 0
      %p63 = por %p61, %p62
      %p64 = scmp.ne.s32.totalorder %s52, %s53
      %p65 = scmp.eq.s32.totalorder %s22, 1
      %p66 = por %p64, %p65
      %p68 = scmp.ne.s32.totalorder %s53, %s67
      %p69 = scmp.eq.s32.totalorder %s22, 0
      %p70 = por %p68, %p69
      %s72 = sadd.s32 %s71, 1
      %p75 = scmp.eq.s32.totalorder %s16, 1
      %p76 = scmp.ne.s32.totalorder %s71, %s73
      %p77 = scmp.eq.s32.totalorder %s16, 0
      %p78 = por %p76, %p77
      %p79 = scmp.ne.s32.totalorder %s71, %s73
      %p80 = scmp.eq.s32.totalorder %s21, 1
      %p81 = por %p79, %p80
      %p82 = scmp.ne.s32.totalorder %s73, %s74
      %p83 = scmp.eq.s32.totalorder %s21, 0
      %p84 = por %p82, %p83
      %p85 = scmp.ne.s32.totalorder %s73, %s74
      %p86 = scmp.eq.s32.totalorder %s22, 1
      %p87 = por %p85, %p86
      %p89 = scmp.ne.s32.totalorder %s74, %s88
      %p90 = scmp.eq.s32.totalorder %s22, 0
      %p91 = por %p89, %p90
      %s93 = sadd.s32 %s92, 1
      %p96 = scmp.eq.s32.totalorder %s16, 1
      %p97 = scmp.ne.s32.totalorder %s92, %s94
      %p98 = scmp.eq.s32.totalorder %s16, 0
      %p99 = por %p97, %p98
      %p100 = scmp.ne.s32.totalorder %s92, %s94
      %p101 = scmp.eq.s32.totalorder %s21, 1
      %p102 = por %p100, %p101
      %p103 = scmp.ne.s32.totalorder %s94, %s95
      %p104 = scmp.eq.s32.totalorder %s21, 0
      %p105 = por %p103, %p104
      %p106 = scmp.ne.s32.totalorder %s94, %s95
      %p107 = scmp.eq.s32.totalorder %s22, 1
      %p108 = por %p106, %p107
      %p110 = scmp.ne.s32.totalorder %s95, %s109
      %p111 = scmp.eq.s32.totalorder %s22, 0
      %p112 = por %p110, %p111
      %s114 = sadd.s32 %s113, 1
      %p117 = scmp.eq.s32.totalorder %s16, 1
      %p118 = scmp.ne.s32.totalorder %s113, %s115
      %p119 = scmp.eq.s32.totalorder %s16, 0
      %p120 = por %p118, %p119
      %p121 = scmp.ne.s32.totalorder %s113, %s115
      %p122 = scmp.eq.s32.totalorder %s21, 1
      %p123 = por %p121, %p122
      %p124 = scmp.ne.s32.totalorder %s115, %s116
      %p125 = scmp.eq.s32.totalorder %s21, 0
      %p126 = por %p124, %p125
      %p127 = scmp.ne.s32.totalorder %s115, %s116
      %p128 = scmp.eq.s32.totalorder %s22, 1
      %p129 = por %p127, %p128
      %p131 = scmp.ne.s32.totalorder %s116, %s130
      %p132 = scmp.eq.s32.totalorder %s22, 0
      %p133 = por %p131, %p132
      %s135 = sadd.s32 %s134, 1
      %p138 = scmp.eq.s32.totalorder %s16, 1
      %p139 = scmp.ne.s32.totalorder %s134, %s136
      %p140 = scmp.eq.s32.totalorder %s16, 0
      %p141 = por %p139, %p140
      %p142 = scmp.ne.s32.totalorder %s134, %s136
      %p143 = scmp.eq.s32.totalorder %s21, 1
      %p144 = por %p142, %p143
      %p145 = scmp.ne.s32.totalorder %s136, %s137
      %p146 = scmp.eq.s32.totalorder %s21, 0
      %p147 = por %p145, %p146
      %p148 = scmp.ne.s32.totalorder %s136, %s137
      %p149 = scmp.eq.s32.totalorder %s22, 1
      %p150 = por %p148, %p149
      %p152 = scmp.ne.s32.totalorder %s137, %s151
      %p153 = scmp.eq.s32.totalorder %s22, 0
      %p154 = por %p152, %p153
      %s156 = sadd.s32 %s155, 1
      %p159 = scmp.eq.s32.totalorder %s16, 1
      %p160 = scmp.ne.s32.totalorder %s155, %s157
      %p161 = scmp.eq.s32.totalorder %s16, 0
      %p162 = por %p160, %p161
      %p163 = scmp.ne.s32.totalorder %s155, %s157
      %p164 = scmp.eq.s32.totalorder %s21, 1
      %p165 = por %p163, %p164
      %p166 = scmp.ne.s32.totalorder %s157, %s158
      %p167 = scmp.eq.s32.totalorder %s21, 0
      %p168 = por %p166, %p167
      %p169 = scmp.ne.s32.totalorder %s157, %s158
      %p170 = scmp.eq.s32.totalorder %s22, 1
      %p171 = por %p169, %p170
      %p173 = scmp.ne.s32.totalorder %s158, %s172
      %p174 = scmp.eq.s32.totalorder %s22, 0
      %p175 = por %p173, %p174
      %s176 = ssub.s32 %s16, %s23
      %p177 = scmp.eq.s32.totalorder %s176, 0
      %s179 = sadd.s32 %s178, 1
      %s180 = scalar_select %p177, %s178, %s179
      %p183 = pneg %p177
      %p184 = scmp.eq.s32.totalorder %s16, 1
      %p185 = por %p183, %p184
      %p186 = scmp.ne.s32.totalorder %s178, %s181
      %p187 = scmp.eq.s32.totalorder %s16, 0
      %p188 = por %p186, %p187
      %p189 = scmp.ne.s32.totalorder %s178, %s181
      %p190 = scmp.eq.s32.totalorder %s21, 1
      %p191 = por %p189, %p190
      %p192 = scmp.ne.s32.totalorder %s181, %s182
      %p193 = scmp.eq.s32.totalorder %s21, 0
      %p194 = por %p192, %p193
      %p195 = scmp.ne.s32.totalorder %s181, %s182
      %p196 = scmp.eq.s32.totalorder %s22, 1
      %p197 = por %p195, %p196
      %p199 = scmp.ne.s32.totalorder %s182, %s198
      %p200 = scmp.eq.s32.totalorder %s22, 0
      %p201 = por %p199, %p200
      %p202 = scmp.le.s32.totalorder 1, %s16
      %p203 = scmp.lt.s32.totalorder %s16, 3
      %p204 = pnand %p202, %p203
      %p205 = pneg %p204
      // Predicated region
      $region9: #{tpu_custom_call.1} parent=5 // pred_check
        _
      $region10: #{tpu_custom_call.1} parent=5 // pred_check_branch
        %207 = sbr.rel (%p204) target = $region12
      $region11: #{tpu_custom_call.1} parent=5 // pred_region
        %s208 = ssub.s32 %s16, 1
        // Predicated region
        $region13: #{tpu_custom_call.1} parent=11 // pred_check
          %p209 = pneg %p63
        $region14: #{tpu_custom_call.1} parent=11 // pred_check_branch
          %211 = sbr.rel (%p209) target = $region16
        $region15: #{tpu_custom_call.1} parent=11 // pred_region
          _
        $region16: #{tpu_custom_call.1} parent=11 // pred_fallthru
          _
        // Predicated region
        $region17: #{tpu_custom_call.1} parent=11 // pred_check
          %p212 = pneg %p84
        $region18: #{tpu_custom_call.1} parent=11 // pred_check_branch
          %214 = sbr.rel (%p212) target = $region20
        $region19: #{tpu_custom_call.1} parent=11 // pred_region
          _
        $region20: #{tpu_custom_call.1} parent=11 // pred_fallthru
          _
        // Predicated region
        $region21: #{tpu_custom_call.1} parent=11 // pred_check
          %p215 = pneg %p105
        $region22: #{tpu_custom_call.1} parent=11 // pred_check_branch
          %217 = sbr.rel (%p215) target = $region24
        $region23: #{tpu_custom_call.1} parent=11 // pred_region
          _
        $region24: #{tpu_custom_call.1} parent=11 // pred_fallthru
          _
        // Predicated region
        $region25: #{tpu_custom_call.1} parent=11 // pred_check
          %p218 = pneg %p126
        $region26: #{tpu_custom_call.1} parent=11 // pred_check_branch
          %220 = sbr.rel (%p218) target = $region28
        $region27: #{tpu_custom_call.1} parent=11 // pred_region
          _
        $region28: #{tpu_custom_call.1} parent=11 // pred_fallthru
          _
        // Predicated region
        $region29: #{tpu_custom_call.1} parent=11 // pred_check
          %p221 = pneg %p147
        $region30: #{tpu_custom_call.1} parent=11 // pred_check_branch
          %223 = sbr.rel (%p221) target = $region32
        $region31: #{tpu_custom_call.1} parent=11 // pred_region
          _
        $region32: #{tpu_custom_call.1} parent=11 // pred_fallthru
          _
        // Predicated region
        $region33: #{tpu_custom_call.1} parent=11 // pred_check
          %p224 = pneg %p168
        $region34: #{tpu_custom_call.1} parent=11 // pred_check_branch
          %226 = sbr.rel (%p224) target = $region36
        $region35: #{tpu_custom_call.1} parent=11 // pred_region
          _
        $region36: #{tpu_custom_call.1} parent=11 // pred_fallthru
          _
      $region12: #{tpu_custom_call.1} parent=5 // pred_fallthru
        _
      %p227 = scmp.lt.s32.totalorder %s16, 2
      // Predicated region
      $region37: #{tpu_custom_call.1} parent=5 // pred_check
        %p228 = pneg %p227
      $region38: #{tpu_custom_call.1} parent=5 // pred_check_branch
        %230 = sbr.rel (%p228) target = $region40
      $region39: #{tpu_custom_call.1} parent=5 // pred_region
        // Predicated region
        $region41: #{tpu_custom_call.1} parent=39 // pred_check
          %p231 = pneg %p36
        $region42: #{tpu_custom_call.1} parent=39 // pred_check_branch
          %233 = sbr.rel (%p231) target = $region44
        $region43: #{tpu_custom_call.1} parent=39 // pred_region
          %p234 = scmp.lt.s32.totalorder %s16, 1
          %s235 = scalar_select %p234, %s16, 1
          %s236 = smul.addr %s235, 8
          %s237 = scalar_lea.vmem %s0, %s236
        $region44: #{tpu_custom_call.1} parent=39 // pred_fallthru
          _
      $region40: #{tpu_custom_call.1} parent=5 // pred_fallthru
        _
      %p238 = scmp.le.s32.totalorder 1, %s16
      %p239 = scmp.lt.s32.totalorder %s16, 3
      %p240 = pnand %p238, %p239
      %p241 = pneg %p240
      // Predicated region
      $region45: #{tpu_custom_call.1} parent=5 // pred_check
        _
      $region46: #{tpu_custom_call.1} parent=5 // pred_check_branch
        %243 = sbr.rel (%p240) target = $region48
      $region47: #{tpu_custom_call.1} parent=5 // pred_region
        %s244 = ssub.s32 %s16, 1
        %p245 = scmp.lt.s32.totalorder %s21, 1
        %s246 = scalar_select %p245, %s21, 1
        %s247 = smul.addr %s246, 8
        %s248 = scalar_lea.vmem %s0, %s247
        %p249 = pneg %p42
        %p250 = pneg %p39
        %p251 = pneg %p63
        %p252 = pneg %p60
        %p253 = pneg %p84
        %p254 = pneg %p81
        %p255 = pneg %p105
        %p256 = pneg %p102
        %p257 = pneg %p126
        %p258 = pneg %p123
        %p259 = pneg %p147
        %p260 = pneg %p144
        %p261 = pneg %p168
        %p262 = pneg %p165
        %p263 = pneg %p194
        %p264 = pneg %p191
        %s265 = sand.u32 %s181, 1
        %s266 = scalar_lea.sflag [#allocation3], %s265
        %s267 = sand.u32 %s181, 1
        %s268 = smul.addr %s267, 8
        %s269 = scalar_lea.vmem [#allocation2], %s268
        %p270 = scmp.lt.s32.totalorder %s21, 1
        %s271 = scalar_select %p270, %s21, 1
        %s272 = smul.addr %s271, 8
        %s273 = scalar_lea.vmem %s0, %s272
        %v274 = vld [vmem:[%s273] sm:$0xff]
        %v275 = vld [vmem:[%s1] sm:$0xff]
        %v276 = vld [vmem:[%s1 + $0x8] sm:$0xff]
        %v277 = vld [vmem:[%s1 + $0x10] sm:$0xff]
        %v278 = vld [vmem:[%s1 + $0x18] sm:$0xff]
        %v279 = vld [vmem:[%s2] sm:$0x1]
        %v281 = vperm.slane %v279, 0
        %vm283 = vcmask 261120
        %v285 = vsel %vm283, %v274, 0
        %287 = vmatpush.msra.mxu0 0.0
        %288 = vmatpush.msra.mxu0 0.0
        %289 = vmatpush.msra.mxu0 0.0
        %290 = vmatpush.msra.mxu0 0.0
        %291 = vmatpush.msra.mxu0 0.0
        %292 = vmatpush.msra.mxu0 0.0
        %293 = vmatpush.msra.mxu0 0.0
        %294 = vmatpush.msra.mxu0 0.0
        %295 = vmatpush.msra.mxu0 0.0
        %296 = vmatpush.msra.mxu0 0.0
        %297 = vmatpush.msra.mxu0 0.0
        %298 = vmatpush.msra.mxu0 0.0
        %299 = vmatpush.msra.mxu0 %v278
        %300 = vmatpush.msra.mxu0 %v277
        %301 = vmatpush.msra.mxu0 %v276
        %302 = vmatpush.msra.mxu0 %v275
        %303 = vmatmul.f32.gmra.mxu0 %v285
        %v304 = vpop.f32.mrf.mxu0
        %v305 = vadd.f32 %v281, %v304
        %306 = vdwg.mxu0
        %v307 = vmax.f32 %v305, 0.0
        %v308 = vld [vmem:[%s3] sm:$0xff]
        %v309 = vld [vmem:[%s3 + $0x8] sm:$0xff]
        %v310 = vld [vmem:[%s3 + $0x10] sm:$0xff]
        %v311 = vld [vmem:[%s3 + $0x18] sm:$0xff]
        %v312 = vld [vmem:[%s3 + $0x20] sm:$0xff]
        %v313 = vld [vmem:[%s3 + $0x28] sm:$0xff]
        %v314 = vld [vmem:[%s3 + $0x30] sm:$0xff]
        %v315 = vld [vmem:[%s3 + $0x38] sm:$0xff]
        %v316 = vld [vmem:[%s4] sm:$0x1]
        %v318 = vperm.slane %v316, 0
        %vm320 = vcmask 523264
        %v322 = vsel %vm320, %v307, 0
        %324 = vmatpush.msra.mxu0 0.0
        %325 = vmatpush.msra.mxu0 0.0
        %326 = vmatpush.msra.mxu0 0.0
        %327 = vmatpush.msra.mxu0 0.0
        %328 = vmatpush.msra.mxu0 0.0
        %329 = vmatpush.msra.mxu0 0.0
        %330 = vmatpush.msra.mxu0 0.0
        %331 = vmatpush.msra.mxu0 0.0
        %332 = vmatpush.msra.mxu0 %v315
        %333 = vmatpush.msra.mxu0 %v314
        %334 = vmatpush.msra.mxu0 %v313
        %335 = vmatpush.msra.mxu0 %v312
        %336 = vmatpush.msra.mxu0 %v311
        %337 = vmatpush.msra.mxu0 %v310
        %338 = vmatpush.msra.mxu0 %v309
        %339 = vmatpush.msra.mxu0 %v308
        %340 = vmatmul.f32.gmra.mxu0 %v322
        %v341 = vpop.f32.mrf.mxu0
        %v342 = vadd.f32 %v318, %v341
        %343 = vdwg.mxu0
        %v344 = vadd.f32 %v342, %v274
        %v345 = vsel %vm283, %v344, 0.0
        %346 = vadd.xlane.f32.xlu0 %v345
        %v347 = vpop.xlane.xlu0 %346
        %v348 = vrcp.pop 32.0
        %v349 = vmul.f32 32.0, %v348
        %v350 = vsub.f32 1.0, %v349
        %v351 = vmul.f32 %v348, %v350
        %v352 = vadd.f32 %v348, %v351
        %vm353 = vweird.f32 %v348
        %v354 = vsel %vm353, %v348, %v352
        %v355 = vmul.f32 %v347, %v354
        %v356 = vsub.f32 %v344, %v355
        %v357 = vmul.f32 %v356, %v356
        %v358 = vsel %vm283, %v357, 0.0
        %359 = vadd.xlane.f32.xlu0 %v358
        %v360 = vpop.xlane.xlu0 %359
        %v361 = vmul.f32 %v360, %v354
        %v362 = vadd.f32 %v361, 1e-05
        %v363 = vrsqrt.pop %v362
        %v364 = vmul.f32 %v363, %v362
        %v365 = vmul.f32 %v364, %v363
        %v366 = vmul.f32 0.5, %v365
        %v367 = vsub.f32 1.5, %v366
        %v368 = vmul.f32 %v363, %v367
        %vm369 = vweird.f32 %v362
        %vm370 = vweird.f32 %v363
        %vm371 = vmor %vm369, %vm370
        %v372 = vsel %vm371, %v363, %v368
        %v373 = vmul.f32 %v356, %v372
        %v374 = vld [vmem:[%s5] sm:$0x1]
        %v376 = vperm.slane %v374, 0
        %v378 = vmul.f32 %v373, %v376
        %v379 = vld [vmem:[%s6] sm:$0x1]
        %v381 = vperm.slane %v379, 0
        %v383 = vadd.f32 %v378, %v381
        %384 = vst.msk [vmem:[%s269] sm:$0xff] %vm283, %v383
        %s385 = sand.u32 %s181, 1
        %s386 = scalar_lea.sflag [#allocation3], %s385
        %s387 = sand.u32 %s181, 1
        %s388 = smul.addr %s387, 8
        %s389 = scalar_lea.vmem [#allocation2], %s388
        // Predicated region
        $region49: #{tpu_custom_call.1} parent=47 // pred_check
          %p390 = pneg %p191
        $region50: #{tpu_custom_call.1} parent=47 // pred_check_branch
          %392 = sbr.rel (%p390) target = $region52
        $region51: #{tpu_custom_call.1} parent=47 // pred_region
          %394 = vsyncadd %s386, 0
          %s395 = smul.addr %s21, 8
          %s396 = scalar_lea.hbm %s7, %s395
          %s398 = sshll.u32 %s389, 4
          %s399 = int_to_ptr.vmem [resolvable:$true] %s398
          %s400 = sshll.u32 %s396, 4
          %s401 = int_to_ptr.hbm [resolvable:$true] %s400
          %403 = dma.vmem_to_hbm [thread:$0]  %s399, 128, %s401, %s386
        $region52: #{tpu_custom_call.1} parent=47 // pred_fallthru
          _
      $region48: #{tpu_custom_call.1} parent=5 // pred_fallthru
        _
      %p404 = scmp.le.s32.totalorder 2, %s16
      // Predicated region
      $region53: #{tpu_custom_call.1} parent=5 // pred_check
        %p405 = pneg %p404
      $region54: #{tpu_custom_call.1} parent=5 // pred_check_branch
        %407 = sbr.rel (%p405) target = $region56
      $region55: #{tpu_custom_call.1} parent=5 // pred_region
        %s408 = ssub.s32 %s16, 2
        // Predicated region
        $region57: #{tpu_custom_call.1} parent=55 // pred_check
          %p409 = pneg %p197
        $region58: #{tpu_custom_call.1} parent=55 // pred_check_branch
          %411 = sbr.rel (%p409) target = $region60
        $region59: #{tpu_custom_call.1} parent=55 // pred_region
          %s412 = sand.u32 %s182, 1
          %s413 = scalar_lea.sflag [#allocation3], %s412
          %s414 = sand.u32 %s182, 1
          %s415 = smul.addr %s414, 8
          %s416 = scalar_lea.vmem [#allocation2], %s415
          %418 = dma.done %s413, 128
        $region60: #{tpu_custom_call.1} parent=55 // pred_fallthru
          _
      $region56: #{tpu_custom_call.1} parent=5 // pred_fallthru
        _
    $region6: #{tpu_custom_call.1} parent=1 // loop_footer
      %s20 = sadd.s32 1, %s16
    $region7: #{tpu_custom_call.1} parent=1 // loop_footer_branch
      %15 = sbr.rel target = $region3
    $region8: #{tpu_custom_call.1} parent=1 // loop_exit
      _
    %419 = vsyncpa [#allocation3], 1
    %s420 = scalar_lea.sflag [#allocation3], 1
    %421 = vsyncpa %s420, 1

</llo_original>
